<compile_context>
chip_gen: v5e
topology: v5e:2x2
jax: 0.10.0
libtpu: 0.0.40
codegen_flags: <defaults>
</compile_context>

<pallas_src>
import functools
import math

import jax
import jax.numpy as jnp
from jax.experimental import pallas as pl
from jax.experimental.pallas import tpu as pltpu


# Scoped-VMEM budget for the matmul kernels: above the 16/32 MiB defaults, with
# headroom on v7x's 64 MiB physical VMEM.
_MM_VMEM_LIMIT = 48 * 1024 * 1024


def _row_tile(M, cap=256):
    """Row-tile size: whole array if small, else a 256-row tile (multiple of 8)."""
    return M if M <= cap else cap


def _mm_params():
    return pltpu.CompilerParams(dimension_semantics=("parallel",),
                                vmem_limit_bytes=_MM_VMEM_LIMIT)


def _ln(x, g, b, eps):
    mu = jnp.mean(x, axis=-1, keepdims=True)
    var = jnp.mean(jnp.square(x - mu), axis=-1, keepdims=True)
    return (x - mu) * jax.lax.rsqrt(var + eps) * g + b


# --------------------------------------------------------------------------
# Part_Attention: chained rollout of blended attention maps
# --------------------------------------------------------------------------

def _attn_chain_kernel(a_ref, o_ref):
    # a_ref: (1, L, T, T) already blended with the identity; o_ref: (1, T, T).
    L = a_ref.shape[1]
    acc = a_ref[0, 0].astype(jnp.float32)
    for i in range(1, L):                      # L static & small -> fully unrolled
        acc = jnp.dot(a_ref[0, i].astype(jnp.float32), acc,
                      preferred_element_type=jnp.float32)   # new map on the LEFT
    o_ref[0] = acc.astype(o_ref.dtype)


def attn_chain(atten_stack, alpha):
    """atten_stack: (B, L, T, T) -> (B, T, T) chained rollout."""
    B, L, T, _ = atten_stack.shape
    eye = jnp.eye(T, dtype=atten_stack.dtype)
    # Identity blend hoisted out of the kernel (constant work, pure VPU filler).
    blended = atten_stack * alpha + (1.0 - alpha) * eye
    return pl.pallas_call(
        _attn_chain_kernel,
        out_shape=jax.ShapeDtypeStruct((B, T, T), atten_stack.dtype),
        grid=(B,),
        in_specs=[pl.BlockSpec((1, L, T, T), lambda b: (b, 0, 0, 0))],
        out_specs=pl.BlockSpec((1, T, T), lambda b: (b, 0, 0)),
        compiler_params=pltpu.CompilerParams(dimension_semantics=("parallel",)),
    )(blended)


# --------------------------------------------------------------------------
# Fully fused attention branch (per batch element):
#   LN1 -> QKV -> multi-head attention -> out-proj -> + residual
# --------------------------------------------------------------------------

def _attn_block_kernel(x_ref, g_ref, b_ref, wq_ref, wk_ref, wv_ref,
                       bq_ref, bk_ref, bv_ref, wo_ref, bo_ref, o_ref,
                       *, heads, scale, eps):
    x = x_ref[0].astype(jnp.float32)                           # (S, D) residual
    h = _ln(x, g_ref[...].astype(jnp.float32), b_ref[...].astype(jnp.float32), eps)
    hb = h.astype(jnp.bfloat16)                    # bf16 operands -> native MXU path

    # QKV projections kept in VMEM (never written back to HBM).
    q = (jnp.dot(hb, wq_ref[...], preferred_element_type=jnp.float32)
         + bq_ref[...].astype(jnp.float32)) * scale            # scale folded into q
    k = jnp.dot(hb, wk_ref[...], preferred_element_type=jnp.float32) \
        + bk_ref[...].astype(jnp.float32)
    v = jnp.dot(hb, wv_ref[...], preferred_element_type=jnp.float32) \
        + bv_ref[...].astype(jnp.float32)
    qb, kb, vb = q.astype(jnp.bfloat16), k.astype(jnp.bfloat16), v.astype(jnp.bfloat16)

    D = q.shape[1]
    dh = D // heads
    outs = []
    for hh in range(heads):                        # heads static -> fully unrolled
        sl = slice(hh * dh, (hh + 1) * dh)
        s = jax.lax.dot_general(qb[:, sl], kb[:, sl], (((1,), (1,)), ((), ())),
                                preferred_element_type=jnp.float32)      # (S, S)
        m = jnp.max(s, axis=-1, keepdims=True)
        p = jnp.exp(s - m)
        denom = jnp.sum(p, axis=-1, keepdims=True)
        p = p * pl.reciprocal(denom, approx=True)              # divide on the EUP
        outs.append(jnp.dot(p.astype(jnp.bfloat16), vb[:, sl],
                            preferred_element_type=jnp.float32))
    attn = jnp.concatenate(outs, axis=-1).astype(jnp.bfloat16)            # (S, D)

    # Out-projection fused with the residual add; one lane-dense (S, D) store.
    out = jnp.dot(attn, wo_ref[...], preferred_element_type=jnp.float32) \
        + bo_ref[...].astype(jnp.float32) + x
    o_ref[0] = out.astype(o_ref.dtype)


def attn_block(x, p, heads, eps=1e-5):
    """x: (B, S, D) f32 -> x + out_proj(MHA(LN1(x)))   (B, S, D)."""
    B, S, D = x.shape
    scale = 1.0 / math.sqrt(D // heads)
    row = pl.BlockSpec((1, S, D), lambda b: (b, 0, 0))
    wsp = pl.BlockSpec((D, D), lambda b: (0, 0))     # resident weights
    vec = pl.BlockSpec((1, D), lambda b: (0, 0))
    return pl.pallas_call(
        functools.partial(_attn_block_kernel, heads=heads, scale=scale, eps=eps),
        out_shape=jax.ShapeDtypeStruct((B, S, D), x.dtype),
        grid=(B,),
        in_specs=[row, vec, vec, wsp, wsp, wsp, vec, vec, vec, wsp, vec],
        out_specs=row,
        compiler_params=_mm_params(),
    )(x, p["ln1_g"], p["ln1_b"], p["wq"], p["wk"], p["wv"],
      p["bq"], p["bk"], p["bv"], p["w_out"], p["b_out"])


# --------------------------------------------------------------------------
# Fully fused MLP branch: LN2 -> fc -> QuickGELU -> proj -> + residual
# --------------------------------------------------------------------------

def _ln_mlp_kernel(x_ref, g_ref, b_ref, wfc_ref, bfc_ref, wpj_ref, bpj_ref,
                   o_ref, *, eps):
    x = x_ref[...].astype(jnp.float32)
    h = _ln(x, g_ref[...].astype(jnp.float32), b_ref[...].astype(jnp.float32), eps)
    a = jnp.dot(h.astype(jnp.bfloat16), wfc_ref[...],
                preferred_element_type=jnp.float32) + bfc_ref[...].astype(jnp.float32)
    a = a * jax.nn.sigmoid(1.702 * a)              # QuickGELU (sigmoid on the EUP)
    y = jnp.dot(a.astype(jnp.bfloat16), wpj_ref[...],
                preferred_element_type=jnp.float32) + bpj_ref[...].astype(jnp.float32)
    o_ref[...] = (y + x).astype(o_ref.dtype)       # fused residual


def ln_mlp_residual(x, g, b, w_fc, b_fc, w_proj, b_proj, eps=1e-5):
    """x: (M, D); w_fc bf16 (D, 4D); w_proj bf16 (4D, D) -> (M, D)."""
    M, D = x.shape
    H = w_fc.shape[1]
    tm = _row_tile(M)
    return pl.pallas_call(
        functools.partial(_ln_mlp_kernel, eps=eps),
        out_shape=jax.ShapeDtypeStruct((M, D), x.dtype),
        grid=(pl.cdiv(M, tm),),
        in_specs=[pl.BlockSpec((tm, D), lambda i: (i, 0)),
                  pl.BlockSpec((1, D), lambda i: (0, 0)),
                  pl.BlockSpec((1, D), lambda i: (0, 0)),
                  pl.BlockSpec((D, H), lambda i: (0, 0)),
                  pl.BlockSpec((1, H), lambda i: (0, 0)),
                  pl.BlockSpec((H, D), lambda i: (0, 0)),
                  pl.BlockSpec((1, D), lambda i: (0, 0))],
        out_specs=pl.BlockSpec((tm, D), lambda i: (i, 0)),
        compiler_params=_mm_params(),
    )(x, g, b, w_fc, b_fc, w_proj, b_proj)


# --------------------------------------------------------------------------
# Standalone LayerNorm (ln_post)
# --------------------------------------------------------------------------

def _layernorm_kernel(x_ref, g_ref, b_ref, o_ref, *, eps):
    x = x_ref[...].astype(jnp.float32)
    y = _ln(x, g_ref[...].astype(jnp.float32), b_ref[...].astype(jnp.float32), eps)
    o_ref[...] = y.astype(o_ref.dtype)


def layernorm(x, g, b, eps=1e-5):
    M, D = x.shape
    tm = _row_tile(M)
    return pl.pallas_call(
        functools.partial(_layernorm_kernel, eps=eps),
        out_shape=jax.ShapeDtypeStruct((M, D), x.dtype),
        grid=(pl.cdiv(M, tm),),
        in_specs=[pl.BlockSpec((tm, D), lambda i: (i, 0)),
                  pl.BlockSpec((1, D), lambda i: (0, 0)),
                  pl.BlockSpec((1, D), lambda i: (0, 0))],
        out_specs=pl.BlockSpec((tm, D), lambda i: (i, 0)),
        compiler_params=pltpu.CompilerParams(dimension_semantics=("parallel",)),
    )(x, g, b)


# --------------------------------------------------------------------------
# Model pieces (glue in JAX, compute in the kernels above)
# --------------------------------------------------------------------------

def part_attention(atten_list_slice, ratio, alpha=0.5, modal=0,
                   token_select_type="all"):
    """Part_Attention.forward; returns the boolean token mask (B, N).

    TODO(synk): original LOCAL_FEATURE calls Part_Attention without `modal` and
    with token_select_type='' (which would assert); we use modal=0, 'all'.
    """
    atten_stack = jnp.stack(atten_list_slice, axis=1)      # (B, L, T, T)
    B, L, T, _ = atten_stack.shape
    N = T - 4
    last_map = attn_chain(atten_stack, alpha)              # Pallas chained matmuls

    if modal == 0:
        pm = (-1, -2)
    elif modal == 1:
        pm = (-1, -3)
    else:
        pm = (-2, -3)

    key_scores = last_map[:, 0, 1:1 + N]
    prompt_scores = last_map[:, pm[0], 1:1 + N] + last_map[:, pm[1], 1:1 + N]
    k_sel = int(N * ratio)

    def topk_mask(scores):
        _, idx = jax.lax.top_k(scores, k_sel)
        mask = jnp.zeros((B, N), dtype=bool)
        return mask.at[jnp.arange(B)[:, None], idx].set(True)

    mask_key = topk_mask(key_scores)
    mask_prompt = topk_mask(prompt_scores)
    if token_select_type == "all":
        return mask_prompt | mask_key
    elif token_select_type == "inner":
        return mask_key
    elif token_select_type == "cross":
        return mask_prompt
    else:
        raise AssertionError("invalid token_select_type")


def resblock_forward(x, p, heads):
    """CLIP ResidualAttentionBlock on batch-major (B, S, D)."""
    B, S, D = x.shape
    # Attention branch: LN1 + QKV + MHA + out-proj + residual, one fused kernel.
    x1 = attn_block(x, p, heads)
    # MLP branch: LN2 + fc + QuickGELU + proj + residual, one fused kernel.
    x2 = ln_mlp_residual(x1.reshape(B * S, D), p["ln2_g"], p["ln2_b"],
                         p["w_fc"], p["b_fc"], p["w_proj"], p["b_proj"])
    return x2.reshape(B, S, D)


def local_feature_forward(feature_list, atten_list, prompt, block_params,
                          layer_indices, ln_post_g, ln_post_b, ratio, heads,
                          alpha=0.5):
    """LOCAL_FEATURE.forward (batch-major internally)."""
    l = prompt.shape[0]
    cls = jnp.transpose(prompt, (1, 0, 2))                 # (B, l, D)
    for p, layer_index in zip(block_params, layer_indices):
        index = layer_index - 1
        mask = part_attention(atten_list[:index + 1], ratio, alpha)        # (B, N)
        feat_tokens = jnp.transpose(feature_list[index][1:], (1, 0, 2))    # (B, N, D)
        feature = feat_tokens * mask[:, :, None].astype(feat_tokens.dtype)
        feat = jnp.concatenate([cls, feature], axis=1)                     # (B, l+N, D)
        cls = resblock_forward(feat, p, heads)[:, :l]
    B, L_, D = cls.shape
    cls = layernorm(cls.reshape(B * L_, D), ln_post_g, ln_post_b).reshape(B, L_, D)
    return cls


# --------------------------------------------------------------------------
# Deterministic parameter init (synthetic weights, no checkpoint)
# --------------------------------------------------------------------------

def init_block_params(key, D):
    ks = jax.random.split(key, 4)
    scale = 0.02
    f32, bf16 = jnp.float32, jnp.bfloat16
    w_in = jax.random.normal(ks[0], (D, 3 * D), f32) * scale
    return {
        "ln1_g": jnp.ones((1, D), f32), "ln1_b": jnp.zeros((1, D), f32),
        "wq": w_in[:, 0 * D:1 * D].astype(bf16),
        "wk": w_in[:, 1 * D:2 * D].astype(bf16),
        "wv": w_in[:, 2 * D:3 * D].astype(bf16),
        "bq": jnp.zeros((1, D), f32),
        "bk": jnp.zeros((1, D), f32),
        "bv": jnp.zeros((1, D), f32),
        "w_out": (jax.random.normal(ks[1], (D, D), f32) * scale).astype(bf16),
        "b_out": jnp.zeros((1, D), f32),
        "ln2_g": jnp.ones((1, D), f32), "ln2_b": jnp.zeros((1, D), f32),
        "w_fc": (jax.random.normal(ks[2], (D, 4 * D), f32) * scale).astype(bf16),
        "b_fc": jnp.zeros((1, 4 * D), f32),
        "w_proj": (jax.random.normal(ks[3], (4 * D, D), f32) * scale).astype(bf16),
        "b_proj": jnp.zeros((1, D), f32),
    }


if __name__ == "__main__":
    key = jax.random.PRNGKey(0)

    # Small shapes consistent with the module (original: D=768, H=12, N=128, T=132).
    B, D, heads = 2, 32, 4
    N, T = 16, 20                    # T = N + 4 (cls + N patches + 3 prompt tokens)
    l = 3                            # prompt length
    depth = 3                        # number of provided feature/attention layers
    layers = 2                       # resblocks kept (the last `layers`)
    layer_indices = [depth - layers + 1 + i for i in range(layers)]   # [2, 3]
    ratio = 0.5

    keys = jax.random.split(key, 1 + 2 * depth + layers)
    prompt = jax.random.normal(keys[0], (l, B, D), jnp.float32)
    feature_list = [jax.random.normal(keys[1 + i], (1 + N, B, D), jnp.float32)
                    for i in range(depth)]
    atten_list = [jax.nn.softmax(
        jax.random.normal(keys[1 + depth + i], (B, T, T), jnp.float32), axis=-1)
        for i in range(depth)]
    block_params = [init_block_params(keys[1 + 2 * depth + i], D)
                    for i in range(layers)]
    ln_post_g = jnp.ones((1, D), jnp.float32)
    ln_post_b = jnp.zeros((1, D), jnp.float32)

    out = local_feature_forward(feature_list, atten_list, prompt, block_params,
                                layer_indices, ln_post_g, ln_post_b, ratio, heads)
    out = jax.block_until_ready(out)
    assert out.shape == (B, l, D), out.shape
    assert jnp.all(jnp.isfinite(out))
    print("KERNEL_OK")
</pallas_src>

<mosaic_0001>
module attributes {stable_mosaic.version = 11 : i64} {
  func.func @_attn_chain_kernel(%arg0: i32, %arg1: memref<1x2x20x20xf32, #tpu.memory_space<vmem>>, %arg2: memref<1x20x20xf32, #tpu.memory_space<vmem>>) attributes {dimension_semantics = [#tpu.dimension_semantics<parallel>], iteration_bounds = array<i64: 2>, scalar_prefetch = 0 : i64, scratch_operands = 0 : i64, tpu.core_type = #tpu.core_type<tc>, window_params = [{transform_indices = @transform_0, window_bounds = array<i64: 1, 2, 20, 20>}, {transform_indices = @transform_1, window_bounds = array<i64: 1, 20, 20>}]} {
    %c0 = arith.constant 0 : index
    %c0_0 = arith.constant 0 : index
    %c0_1 = arith.constant 0 : index
    %c0_2 = arith.constant 0 : index
    %0 = vector.load %arg1[%c0, %c0_0, %c0_1, %c0_2] : memref<1x2x20x20xf32, #tpu.memory_space<vmem>>, vector<1x1x20x20xf32>
    %1 = vector.shape_cast %0 : vector<1x1x20x20xf32> to vector<20x20xf32>
    %c0_3 = arith.constant 0 : index
    %c1 = arith.constant 1 : index
    %c0_4 = arith.constant 0 : index
    %c0_5 = arith.constant 0 : index
    %2 = vector.load %arg1[%c0_3, %c1, %c0_4, %c0_5] : memref<1x2x20x20xf32, #tpu.memory_space<vmem>>, vector<1x1x20x20xf32>
    %3 = vector.shape_cast %2 : vector<1x1x20x20xf32> to vector<20x20xf32>
    %cst = arith.constant dense<0.000000e+00> : vector<20x20xf32>
    %4 = tpu.matmul %3, %1, %cst {dimension_numbers = #tpu.dot_dimension_numbers<[1], [0], [0], [1], [0, 0, 1, 1], [], []>} : vector<20x20xf32>, vector<20x20xf32>, vector<20x20xf32> -> vector<20x20xf32>
    %c0_6 = arith.constant 0 : index
    %c0_7 = arith.constant 0 : index
    %c0_8 = arith.constant 0 : index
    %5 = vector.load %arg2[%c0_6, %c0_7, %c0_8] : memref<1x20x20xf32, #tpu.memory_space<vmem>>, vector<1x20x20xf32>
    %6 = vector.shape_cast %5 : vector<1x20x20xf32> to vector<20x20xf32>
    %7 = vector.shape_cast %4 : vector<20x20xf32> to vector<1x20x20xf32>
    tpu.vector_store %arg2[%c0_6, %c0_7, %c0_8], %7 {strides = array<i32>} : memref<1x20x20xf32, #tpu.memory_space<vmem>>, vector<1x20x20xf32>,
    return
  }
  func.func @transform_0(%arg0: i32) -> (i32, i32, i32, i32) {
    %c0_i32 = arith.constant 0 : i32
    %c0_i32_0 = arith.constant 0 : i32
    %c0_i32_1 = arith.constant 0 : i32
    %c0_i32_2 = arith.constant 0 : i32
    return %arg0, %c0_i32, %c0_i32_0, %c0_i32_1 : i32, i32, i32, i32
  }
  func.func @transform_1(%arg0: i32) -> (i32, i32, i32) {
    %c0_i32 = arith.constant 0 : i32
    %c0_i32_0 = arith.constant 0 : i32
    %c0_i32_1 = arith.constant 0 : i32
    return %arg0, %c0_i32, %c0_i32_0 : i32, i32, i32
  }
}

</mosaic_0001>

<llo_original>
// kernel: tpu_custom_call.1
$region0: #{tpu_custom_call.1}
  #allocation0 [shape = 'u32[]', space=smem, size = 0x4, offset = 0x4, fixed_abs, tag = 'smem constant byte address 0x4 - core index']
  #allocation1 [shape = 'u32[72,128]{1,0:T(1,128)}', space=vmem, size = 0x9000, scoped, tag = 'internal scratch']
  %s0 = inlined_call_operand.vmem [shape: f32[2,2,20,20], index: 0, kind: input, shape index: {}]
  %s1 = inlined_call_operand.vmem [shape: f32[2,20,20], index: 1, kind: output, shape index: {}]
  %s2 = sld [smem:[#allocation0]]
  $region37: #{tpu_custom_call.1} parent=0
    _
  %s4 = ssub.s32 1, %s2
  %s5 = scalar_select 0, %s4, %s2
  loop: start=0, step=1, limit=4
  $region2: #{tpu_custom_call.1} parent=0 // loop_pre_header
    _
  $region3: #{tpu_custom_call.1} parent=0 // loop_header
    %s7 = sphi 0, %s11
    %p8 = scmp.ge.s32.totalorder %s7, 4
    %s17 = sphi 0, %s19
    %s20 = sphi 0, %s17
    %s21 = sphi 0, %s20
    %s37 = sphi 0, %s21
    %s43 = sphi 0, %s45
    %s46 = sphi 0, %s43
    %s47 = sphi 0, %s46
    %s63 = sphi 0, %s47
  $region4: #{tpu_custom_call.1} parent=0 // loop_header_branch
    %10 = sbr.rel (%p8) target = $region8
  $region5: #{tpu_custom_call.1} parent=0 // loop_body
    %s12 = ssub.s32 %s7, 1
    %s13 = ssub.s32 %s7, 2
    %s14 = sadd.s32 %s7, 1
    %s15 = ssub.s32 %s7, %s14
    %p16 = scmp.eq.s32.totalorder %s15, 0
    %s18 = sadd.s32 %s17, 1
    %s19 = scalar_select %p16, %s17, %s18
    %p22 = pneg %p16
    %p23 = scmp.eq.s32.totalorder %s7, 1
    %p24 = por %p22, %p23
    %p25 = scmp.ne.s32.totalorder %s17, %s20
    %p26 = scmp.eq.s32.totalorder %s7, 0
    %p27 = por %p25, %p26
    %p28 = scmp.ne.s32.totalorder %s17, %s20
    %p29 = scmp.eq.s32.totalorder %s12, 1
    %p30 = por %p28, %p29
    %p31 = scmp.ne.s32.totalorder %s20, %s21
    %p32 = scmp.eq.s32.totalorder %s12, 0
    %p33 = por %p31, %p32
    %p34 = scmp.ne.s32.totalorder %s20, %s21
    %p35 = scmp.eq.s32.totalorder %s13, 1
    %p36 = por %p34, %p35
    %p38 = scmp.ne.s32.totalorder %s21, %s37
    %p39 = scmp.eq.s32.totalorder %s13, 0
    %p40 = por %p38, %p39
    %s41 = ssub.s32 %s7, %s14
    %p42 = scmp.eq.s32.totalorder %s41, 0
    %s44 = sadd.s32 %s43, 1
    %s45 = scalar_select %p42, %s43, %s44
    %p48 = pneg %p42
    %p49 = scmp.eq.s32.totalorder %s7, 1
    %p50 = por %p48, %p49
    %p51 = scmp.ne.s32.totalorder %s43, %s46
    %p52 = scmp.eq.s32.totalorder %s7, 0
    %p53 = por %p51, %p52
    %p54 = scmp.ne.s32.totalorder %s43, %s46
    %p55 = scmp.eq.s32.totalorder %s12, 1
    %p56 = por %p54, %p55
    %p57 = scmp.ne.s32.totalorder %s46, %s47
    %p58 = scmp.eq.s32.totalorder %s12, 0
    %p59 = por %p57, %p58
    %p60 = scmp.ne.s32.totalorder %s46, %s47
    %p61 = scmp.eq.s32.totalorder %s13, 1
    %p62 = por %p60, %p61
    %p64 = scmp.ne.s32.totalorder %s47, %s63
    %p65 = scmp.eq.s32.totalorder %s13, 0
    %p66 = por %p64, %p65
    %p67 = scmp.le.s32.totalorder 1, %s7
    %p68 = scmp.lt.s32.totalorder %s7, 3
    %p69 = pnand %p67, %p68
    %p70 = pneg %p69
    // Predicated region
    $region9: #{tpu_custom_call.1} parent=5 // pred_check
      _
    $region10: #{tpu_custom_call.1} parent=5 // pred_check_branch
      %72 = sbr.rel (%p69) target = $region12
    $region11: #{tpu_custom_call.1} parent=5 // pred_region
      %s73 = ssub.s32 %s7, 1
    $region12: #{tpu_custom_call.1} parent=5 // pred_fallthru
      _
    %p74 = scmp.lt.s32.totalorder %s7, 2
    // Predicated region
    $region13: #{tpu_custom_call.1} parent=5 // pred_check
      %p75 = pneg %p74
    $region14: #{tpu_custom_call.1} parent=5 // pred_check_branch
      %77 = sbr.rel (%p75) target = $region16
    $region15: #{tpu_custom_call.1} parent=5 // pred_region
      // Predicated region
      $region17: #{tpu_custom_call.1} parent=15 // pred_check
        %p78 = pneg %p27
      $region18: #{tpu_custom_call.1} parent=15 // pred_check_branch
        %80 = sbr.rel (%p78) target = $region20
      $region19: #{tpu_custom_call.1} parent=15 // pred_region
        %p81 = scmp.lt.s32.totalorder %s7, 1
        %s82 = scalar_select %p81, %s7, 1
        %s83 = smul.addr %s82, 6
        %s84 = smul.addr %s83, 8
        %s85 = scalar_lea.vmem %s0, %s84
      $region20: #{tpu_custom_call.1} parent=15 // pred_fallthru
        _
    $region16: #{tpu_custom_call.1} parent=5 // pred_fallthru
      _
    %p86 = scmp.le.s32.totalorder 1, %s7
    %p87 = scmp.lt.s32.totalorder %s7, 3
    %p88 = pnand %p86, %p87
    %p89 = pneg %p88
    // Predicated region
    $region21: #{tpu_custom_call.1} parent=5 // pred_check
      _
    $region22: #{tpu_custom_call.1} parent=5 // pred_check_branch
      %91 = sbr.rel (%p88) target = $region24
    $region23: #{tpu_custom_call.1} parent=5 // pred_region
      %s92 = ssub.s32 %s7, 1
      %p93 = scmp.lt.s32.totalorder %s12, 1
      %s94 = scalar_select %p93, %s12, 1
      %s95 = smul.addr %s94, 6
      %s96 = smul.addr %s95, 8
      %s97 = scalar_lea.vmem %s0, %s96
      %p98 = pneg %p33
      %p99 = pneg %p30
      %p100 = pneg %p59
      %p101 = pneg %p56
      %p102 = scmp.lt.s32.totalorder %s12, 1
      %s103 = scalar_select %p102, %s12, 1
      %s104 = smul.addr %s103, 3
      %s105 = smul.addr %s104, 8
      %s106 = scalar_lea.vmem %s1, %s105
      %p107 = scmp.lt.s32.totalorder %s12, 1
      %s108 = scalar_select %p107, %s12, 1
      %s109 = smul.addr %s108, 6
      %s110 = smul.addr %s109, 8
      %s111 = scalar_lea.vmem %s0, %s110
      %p112 = scmp.lt.s32.totalorder %s12, 1
      %s113 = scalar_select %p112, %s12, 1
      %s114 = smul.addr %s113, 3
      %s115 = smul.addr %s114, 8
      %s116 = scalar_lea.vmem %s1, %s115
      %v117 = vld [vmem:[%s111] sm:$0xff]
      %v118 = vld [vmem:[%s111 + $0x8] sm:$0xff]
      %v119 = vld [vmem:[%s111 + $0x10] sm:$0xf]
      %s120 = scalar_lea.vmem %s111, 24
      %v121 = vld [vmem:[%s120] sm:$0xff]
      %v122 = vld [vmem:[%s120 + $0x8] sm:$0xff]
      %v123 = vld [vmem:[%s120 + $0x10] sm:$0xf]
      %vm124 = vcmask 162816
      %v126 = vsel %vm124, %v121, 0
      %v129 = vsel %vm124, %v122, 0
      %v132 = vsel %vm124, %v123, 0
      %vm134 = vcmask 1043456
      %v136 = vsel %vm134, %v119, 0
      %138 = vmatpush.msra.mxu0 0.0
      %139 = vmatpush.msra.mxu0 0.0
      %140 = vmatpush.msra.mxu0 0.0
      %141 = vmatpush.msra.mxu0 0.0
      %142 = vmatpush.msra.mxu0 0.0
      %143 = vmatpush.msra.mxu0 0.0
      %144 = vmatpush.msra.mxu0 0.0
      %145 = vmatpush.msra.mxu0 0.0
      %146 = vmatpush.msra.mxu0 0.0
      %147 = vmatpush.msra.mxu0 0.0
      %148 = vmatpush.msra.mxu0 0.0
      %149 = vmatpush.msra.mxu0 0.0
      %150 = vmatpush.msra.mxu0 0.0
      %151 = vmatpush.msra.mxu0 %v136
      %152 = vmatpush.msra.mxu0 %v118
      %153 = vmatpush.msra.mxu0 %v117
      %154 = vmatmul.f32.gmra.mxu0 %v126
      %v155 = vpop.f32.mrf.mxu0
      %v156 = vadd.f32 0.0, %v155
      %157 = vmatmul.f32.gmra.mxu0 %v129
      %v158 = vpop.f32.mrf.mxu0
      %v159 = vadd.f32 0.0, %v158
      %160 = vmatmul.f32.gmra.mxu0 %v132
      %v161 = vpop.f32.mrf.mxu0
      %v162 = vadd.f32 0.0, %v161
      %163 = vdwg.mxu0
      %164 = vst.msk [vmem:[%s116] sm:$0xff] %vm124, %v156
      %165 = vst.msk [vmem:[%s116 + $0x8] sm:$0xff] %vm124, %v159
      %vm166 = vcmask 158720
      %167 = vst.msk [vmem:[%s116 + $0x10] sm:$0xf] %vm166, %v162
      %p168 = scmp.lt.s32.totalorder %s12, 1
      %s169 = scalar_select %p168, %s12, 1
      %s170 = smul.addr %s169, 3
      %s171 = smul.addr %s170, 8
      %s172 = scalar_lea.vmem %s1, %s171
      // Predicated region
      $region25: #{tpu_custom_call.1} parent=23 // pred_check
        %p173 = pneg %p56
      $region26: #{tpu_custom_call.1} parent=23 // pred_check_branch
        %175 = sbr.rel (%p173) target = $region28
      $region27: #{tpu_custom_call.1} parent=23 // pred_region
        _
      $region28: #{tpu_custom_call.1} parent=23 // pred_fallthru
        _
    $region24: #{tpu_custom_call.1} parent=5 // pred_fallthru
      _
    %p176 = scmp.le.s32.totalorder 2, %s7
    // Predicated region
    $region29: #{tpu_custom_call.1} parent=5 // pred_check
      %p177 = pneg %p176
    $region30: #{tpu_custom_call.1} parent=5 // pred_check_branch
      %179 = sbr.rel (%p177) target = $region32
    $region31: #{tpu_custom_call.1} parent=5 // pred_region
      %s180 = ssub.s32 %s7, 2
      // Predicated region
      $region33: #{tpu_custom_call.1} parent=31 // pred_check
        %p181 = pneg %p62
      $region34: #{tpu_custom_call.1} parent=31 // pred_check_branch
        %183 = sbr.rel (%p181) target = $region36
      $region35: #{tpu_custom_call.1} parent=31 // pred_region
        %p184 = scmp.lt.s32.totalorder %s13, 1
        %s185 = scalar_select %p184, %s13, 1
        %s186 = smul.addr %s185, 3
        %s187 = smul.addr %s186, 8
        %s188 = scalar_lea.vmem %s1, %s187
      $region36: #{tpu_custom_call.1} parent=31 // pred_fallthru
        _
    $region32: #{tpu_custom_call.1} parent=5 // pred_fallthru
      _
  $region6: #{tpu_custom_call.1} parent=0 // loop_footer
    %s11 = sadd.s32 1, %s7
  $region7: #{tpu_custom_call.1} parent=0 // loop_footer_branch
    %6 = sbr.rel target = $region3
  $region8: #{tpu_custom_call.1} parent=0 // loop_exit
    _

</llo_original>
